<compile_context>
chip_gen: v7x
topology: tpu7x:2x2x1
jax: 0.10.0
libtpu: 0.0.40
codegen_flags: <defaults>
</compile_context>

<pallas_src>
import functools

import jax
import jax.numpy as jnp
from jax.experimental import pallas as pl
from jax.experimental.pallas import tpu as pltpu


def _discriminator_kernel(x_ref, w_ref, b_ref, o_ref, acc_ref, *, inv_seq_len):
    # x_ref: (tB, tS, H) native dtype   w_ref: (H, Cp)   b_ref: (1, Cp) f32
    # o_ref: (tB, Cp) f32               acc_ref: (tB, H) f32 scratch
    s = pl.program_id(1)

    @pl.when(s == 0)
    def _():
        acc_ref[...] = jnp.zeros_like(acc_ref)

    # Partial sequence-sum of this tile, accumulated in f32 while x stays in
    # its native dtype (no full-tile up-cast).
    acc_ref[...] += jnp.sum(x_ref[...], axis=1, dtype=jnp.float32)

    @pl.when(s == pl.num_programs(1) - 1)
    def _():
        pooled = acc_ref[...] * inv_seq_len                      # (tB, H) f32
        logits = jnp.dot(pooled, w_ref[...].astype(jnp.float32),
                         preferred_element_type=jnp.float32)     # (tB, Cp)
        o_ref[...] = (logits + b_ref[...]).astype(o_ref.dtype)


def discriminator_forward(x, w, b, *, seq_tile=None,
                          vmem_limit_bytes=48 * 1024 * 1024):
    """x: (B, S, H), w: (H, C), b: (C,) -> logits (B, C) float32."""
    B, S, H = x.shape
    H_w, C = w.shape
    assert H_w == H

    # Lane-dense output: pad the class dim to a multiple of 128 with zero
    # weight/bias columns; slice the real logits out afterwards.
    C_pad = max(128, pl.cdiv(C, 128) * 128)
    w_p = jnp.zeros((H, C_pad), dtype=w.dtype).at[:, :C].set(w)
    b_p = jnp.zeros((1, C_pad), dtype=jnp.float32).at[0, :C].set(
        b.astype(jnp.float32))

    # Batch tile: sublane-aligned (multiple of 8) when possible, otherwise the
    # whole (small) batch in one tile so the output block equals the full dim.
    tB = min(B, 8) if (B % 8 == 0) else B

    # Sequence tile: largest multiple of 8 dividing S whose double-buffered x
    # tile stays within a modest VMEM budget (safe on v7x's 64 MiB VMEM as
    # well as v5e/v6e's 128 MiB).
    if seq_tile is None:
        budget = 8 * 1024 * 1024          # per-buffer x-tile budget
        tS = S
        best = None
        for cand in range(8, S + 1, 8):
            if S % cand == 0 and tB * cand * H * x.dtype.itemsize <= budget:
                best = cand
        if best is not None:
            tS = best
    else:
        tS = seq_tile
    assert S % tS == 0 and B % tB == 0

    kernel = functools.partial(_discriminator_kernel, inv_seq_len=1.0 / S)

    out = pl.pallas_call(
        kernel,
        out_shape=jax.ShapeDtypeStruct((B, C_pad), jnp.float32),
        grid_spec=pltpu.PrefetchScalarGridSpec(
            num_scalar_prefetch=0,
            grid=(B // tB, S // tS),
            in_specs=[
                pl.BlockSpec((tB, tS, H), lambda bi, si: (bi, si, 0)),
                pl.BlockSpec((H, C_pad), lambda bi, si: (0, 0)),
                pl.BlockSpec((1, C_pad), lambda bi, si: (0, 0)),
            ],
            out_specs=pl.BlockSpec((tB, C_pad), lambda bi, si: (bi, 0)),
            scratch_shapes=[pltpu.VMEM((tB, H), jnp.float32)],
        ),
        compiler_params=pltpu.CompilerParams(
            dimension_semantics=("parallel", "arbitrary"),
            vmem_limit_bytes=vmem_limit_bytes,
        ),
    )(x, w_p, b_p)
    return out[:, :C]


def reference_forward(x, w, b):
    pooled = jnp.mean(x.astype(jnp.float32), axis=1)
    return pooled @ w.astype(jnp.float32) + b.astype(jnp.float32)


if __name__ == "__main__":
    # Small deterministic shapes; seq=16 with seq_tile=8 exercises the
    # accumulator / multi-step reduction path.
    batch, max_seq_length, hidden, num_labels = 2, 16, 32, 2

    key = jax.random.PRNGKey(0)
    kx, kw, kb = jax.random.split(key, 3)
    x = jax.random.normal(kx, (batch, max_seq_length, hidden), dtype=jnp.float32)
    w = (jax.random.normal(kw, (hidden, num_labels), dtype=jnp.float32)
         * (1.0 / jnp.sqrt(hidden)))
    b = jax.random.normal(kb, (num_labels,), dtype=jnp.float32) * 0.01

    logits = discriminator_forward(x, w, b, seq_tile=8)
    logits = jax.block_until_ready(logits)

    ref = reference_forward(x, w, b)
    assert logits.shape == (batch, num_labels)
    assert jnp.allclose(logits, ref, atol=1e-4, rtol=1e-4), (logits, ref)

    print("KERNEL_OK")
</pallas_src>

<mosaic_0001>
module attributes {stable_mosaic.version = 11 : i64} {
  func.func @_discriminator_kernel(%arg0: i32, %arg1: i32, %arg2: memref<2x8x32xf32, #tpu.memory_space<vmem>>, %arg3: memref<32x128xf32, #tpu.memory_space<vmem>>, %arg4: memref<1x128xf32, #tpu.memory_space<vmem>>, %arg5: memref<2x128xf32, #tpu.memory_space<vmem>>, %arg6: memref<2x32xf32, #tpu.memory_space<vmem>>) attributes {dimension_semantics = [#tpu.dimension_semantics<parallel>, #tpu.dimension_semantics<arbitrary>], iteration_bounds = array<i64: 1, 2>, scalar_prefetch = 0 : i64, scratch_operands = 1 : i64, tpu.core_type = #tpu.core_type<tc>, window_params = [{transform_indices = @transform_0, window_bounds = array<i64: 2, 8, 32>}, {pipeline_mode = #tpu.pipeline_mode<synchronous>, transform_indices = @transform_1, window_bounds = array<i64: 32, 128>}, {pipeline_mode = #tpu.pipeline_mode<synchronous>, transform_indices = @transform_2, window_bounds = array<i64: 1, 128>}, {transform_indices = @transform_3, window_bounds = array<i64: 2, 128>}]} {
    %c0_i32 = arith.constant 0 : i32
    %0 = arith.cmpi eq, %arg1, %c0_i32 : i32
    %1 = arith.extui %0 : i1 to i32
    %c0_i32_0 = arith.constant 0 : i32
    %2 = arith.cmpi ne, %1, %c0_i32_0 : i32
    scf.if %2 {
      %cst_8 = arith.constant 0.000000e+00 : f32
      %11 = vector.broadcast %cst_8 : f32 to vector<2x32xf32>
      %c0_9 = arith.constant 0 : index
      %c0_10 = arith.constant 0 : index
      %12 = vector.load %arg6[%c0_9, %c0_10] : memref<2x32xf32, #tpu.memory_space<vmem>>, vector<2x32xf32>
      tpu.vector_store %arg6[%c0_9, %c0_10], %11 {strides = array<i32>} : memref<2x32xf32, #tpu.memory_space<vmem>>, vector<2x32xf32>,
    } else {
    }
    %c0 = arith.constant 0 : index
    %c0_1 = arith.constant 0 : index
    %3 = vector.load %arg6[%c0, %c0_1] : memref<2x32xf32, #tpu.memory_space<vmem>>, vector<2x32xf32>
    %c0_2 = arith.constant 0 : index
    %c0_3 = arith.constant 0 : index
    %c0_4 = arith.constant 0 : index
    %4 = vector.load %arg2[%c0_2, %c0_3, %c0_4] : memref<2x8x32xf32, #tpu.memory_space<vmem>>, vector<2x8x32xf32>
    %cst = arith.constant dense<0.000000e+00> : vector<2x32xf32>
    %5 = vector.multi_reduction <add>, %4, %cst [1] : vector<2x8x32xf32> to vector<2x32xf32>
    %6 = arith.addf %3, %5 : vector<2x32xf32>
    %c0_5 = arith.constant 0 : index
    %c0_6 = arith.constant 0 : index
    %7 = vector.load %arg6[%c0_5, %c0_6] : memref<2x32xf32, #tpu.memory_space<vmem>>, vector<2x32xf32>
    tpu.vector_store %arg6[%c0_5, %c0_6], %6 {strides = array<i32>} : memref<2x32xf32, #tpu.memory_space<vmem>>, vector<2x32xf32>,
    %c1_i32 = arith.constant 1 : i32
    %8 = arith.cmpi eq, %arg1, %c1_i32 : i32
    %9 = arith.extui %8 : i1 to i32
    %c0_i32_7 = arith.constant 0 : i32
    %10 = arith.cmpi ne, %9, %c0_i32_7 : i32
    scf.if %10 {
      %c0_8 = arith.constant 0 : index
      %c0_9 = arith.constant 0 : index
      %11 = vector.load %arg6[%c0_8, %c0_9] : memref<2x32xf32, #tpu.memory_space<vmem>>, vector<2x32xf32>
      %cst_10 = arith.constant 6.250000e-02 : f32
      %12 = vector.broadcast %cst_10 : f32 to vector<2x32xf32>
      %13 = arith.mulf %11, %12 : vector<2x32xf32>
      %c0_11 = arith.constant 0 : index
      %c0_12 = arith.constant 0 : index
      %14 = vector.load %arg3[%c0_11, %c0_12] : memref<32x128xf32, #tpu.memory_space<vmem>>, vector<32x128xf32>
      %cst_13 = arith.constant dense<0.000000e+00> : vector<2x128xf32>
      %15 = tpu.matmul %13, %14, %cst_13 {dimension_numbers = #tpu.dot_dimension_numbers<[1], [0], [0], [1], [0, 0, 1, 1], [], []>} : vector<2x32xf32>, vector<32x128xf32>, vector<2x128xf32> -> vector<2x128xf32>
      %c0_14 = arith.constant 0 : index
      %c0_15 = arith.constant 0 : index
      %16 = vector.load %arg4[%c0_14, %c0_15] : memref<1x128xf32, #tpu.memory_space<vmem>>, vector<1x128xf32>
      %17 = vector.broadcast %16 : vector<1x128xf32> to vector<2x128xf32>
      %18 = arith.addf %15, %17 : vector<2x128xf32>
      %c0_16 = arith.constant 0 : index
      %c0_17 = arith.constant 0 : index
      %19 = vector.load %arg5[%c0_16, %c0_17] : memref<2x128xf32, #tpu.memory_space<vmem>>, vector<2x128xf32>
      tpu.vector_store %arg5[%c0_16, %c0_17], %18 {strides = array<i32>} : memref<2x128xf32, #tpu.memory_space<vmem>>, vector<2x128xf32>,
    } else {
    }
    return
  }
  func.func @transform_0(%arg0: i32, %arg1: i32) -> (i32, i32, i32) {
    %c0_i32 = arith.constant 0 : i32
    %c0_i32_0 = arith.constant 0 : i32
    return %arg0, %arg1, %c0_i32 : i32, i32, i32
  }
  func.func @transform_1(%arg0: i32, %arg1: i32) -> (i32, i32) {
    %c0_i32 = arith.constant 0 : i32
    %c0_i32_0 = arith.constant 0 : i32
    %c0_i32_1 = arith.constant 0 : i32
    return %c0_i32, %c0_i32_0 : i32, i32
  }
  func.func @transform_2(%arg0: i32, %arg1: i32) -> (i32, i32) {
    %c0_i32 = arith.constant 0 : i32
    %c0_i32_0 = arith.constant 0 : i32
    %c0_i32_1 = arith.constant 0 : i32
    return %c0_i32, %c0_i32_0 : i32, i32
  }
  func.func @transform_3(%arg0: i32, %arg1: i32) -> (i32, i32) {
    %c0_i32 = arith.constant 0 : i32
    %c0_i32_0 = arith.constant 0 : i32
    return %arg0, %c0_i32 : i32, i32
  }
}

</mosaic_0001>

<llo_original>
// kernel: tpu_custom_call.1
$region0: #{tpu_custom_call.1}
  #allocation0 [shape = 'u32[]', space=smem, size = 0x4, offset = 0x4, fixed_abs, tag = 'smem constant byte address 0x4 - core index']
  #allocation1 [shape = 'u32[144,128]{1,0:T(1,128)}', space=vmem, size = 0x12000, scoped, tag = 'internal scratch']
  #allocation2 [shape = 'f32[2,32]{1,0:T(2,128)}', space=vmem, size = 0x400, scoped, tag = 'scratch operand']
  %s0 = inlined_call_operand.hbm [shape: f32[2,16,32], index: 0, kind: input, shape index: {}]
  %s1 = inlined_call_operand.hbm [shape: f32[32,128], index: 1, kind: input, shape index: {}]
  %s2 = inlined_call_operand.vmem [shape: f32[1,128], index: 2, kind: input, shape index: {}]
  %s3 = inlined_call_operand.hbm [shape: f32[2,128], index: 3, kind: output, shape index: {}]
  %s4 = sld [smem:[#allocation0]]
  $region61: #{tpu_custom_call.1} parent=0
    _
  %s6 = ssub.s32 1, %s4
  %s7 = scalar_select 0, %s6, %s4
  $region1: #{tpu_custom_call.1} parent=0
    #allocation3 [shape = 'u8[16384]{0}', space=vmem, size = 0x4000, scoped, tag = 'input window, operand 0']
    #allocation4 [shape = 's32[2]{0}', space=sflag, size = 0x8, scoped, tag = 'scoped memory for tpu_custom_call.1']
    #allocation5 [shape = 's32[2]{0}', space=sflag, size = 0x8, scoped, tag = 'scoped memory for tpu_custom_call.1']
    #allocation6 [shape = 'u8[16384]{0}', space=vmem, size = 0x4000, scoped, tag = 'input window, operand 1, single buffered']
    #allocation7 [shape = 's32[1]{0}', space=sflag, size = 0x4, scoped, tag = 'scoped memory for tpu_custom_call.1']
    #allocation8 [shape = 'u8[1024]{0}', space=vmem, size = 0x400, scoped, tag = 'output window, operand 0, single buffered']
    %8 = vsyncpa [#allocation4], 0
    %s9 = scalar_lea.sflag [#allocation4], 1
    %10 = vsyncpa %s9, 0
    %11 = vsyncpa [#allocation7], 0
    %12 = vsyncpa [#allocation5], 0
    loop: start=0, step=1, limit=4
    $region2: #{tpu_custom_call.1} parent=1 // loop_pre_header
      _
    $region3: #{tpu_custom_call.1} parent=1 // loop_header
      %s14 = sphi 0, %s18
      %p15 = scmp.ge.s32.totalorder %s14, 4
      %s21 = sphi 0, %s33
      %s22 = sphi 0, %s29
      %s23 = sphi 0, %s21
      %s24 = sphi 0, %s22
      %s25 = sphi 0, %s23
      %s26 = sphi 0, %s24
      %s38 = sphi 0, %s40
      %s41 = sphi 0, %s38
      %s42 = sphi 0, %s41
      %s58 = sphi 0, %s42
      %s62 = sphi 0, %s62
      %s64 = sphi 0, %s62
      %s65 = sphi 0, %s64
      %s79 = sphi 0, %s65
      %s83 = sphi 0, %s83
      %s85 = sphi 0, %s83
      %s86 = sphi 0, %s85
      %s100 = sphi 0, %s86
      %s106 = sphi 0, %s108
      %s109 = sphi 0, %s106
      %s110 = sphi 0, %s109
      %s126 = sphi 0, %s110
    $region4: #{tpu_custom_call.1} parent=1 // loop_header_branch
      %17 = sbr.rel (%p15) target = $region8
    $region5: #{tpu_custom_call.1} parent=1 // loop_body
      %s19 = ssub.s32 %s14, 1
      %s20 = ssub.s32 %s14, 2
      %s27 = sadd.s32 1, %s22
      %p28 = scmp.ge.s32.totalorder %s27, 2
      %s29 = scalar_select %p28, 0, %s27
      %s30 = sadd.s32 1, %s21
      %s31 = scalar_select %p28, %s30, %s21
      %p32 = scmp.ge.s32.totalorder %s31, 1
      %s33 = scalar_select %p32, 0, %s31
      %s34 = ssub.s32 %s21, %s33
      %s35 = ssub.s32 %s22, %s29
      %s36 = sor.u32 %s34, %s35
      %p37 = scmp.eq.s32.totalorder %s36, 0
      %s39 = sadd.s32 %s38, 1
      %s40 = scalar_select %p37, %s38, %s39
      %p43 = pneg %p37
      %p44 = scmp.eq.s32.totalorder %s14, 1
      %p45 = por %p43, %p44
      %p46 = scmp.ne.s32.totalorder %s38, %s41
      %p47 = scmp.eq.s32.totalorder %s14, 0
      %p48 = por %p46, %p47
      %p49 = scmp.ne.s32.totalorder %s38, %s41
      %p50 = scmp.eq.s32.totalorder %s19, 1
      %p51 = por %p49, %p50
      %p52 = scmp.ne.s32.totalorder %s41, %s42
      %p53 = scmp.eq.s32.totalorder %s19, 0
      %p54 = por %p52, %p53
      %p55 = scmp.ne.s32.totalorder %s41, %s42
      %p56 = scmp.eq.s32.totalorder %s20, 1
      %p57 = por %p55, %p56
      %p59 = scmp.ne.s32.totalorder %s42, %s58
      %p60 = scmp.eq.s32.totalorder %s20, 0
      %p61 = por %p59, %p60
      %s63 = sadd.s32 %s62, 1
      %p66 = scmp.eq.s32.totalorder %s14, 1
      %p67 = scmp.ne.s32.totalorder %s62, %s64
      %p68 = scmp.eq.s32.totalorder %s14, 0
      %p69 = por %p67, %p68
      %p70 = scmp.ne.s32.totalorder %s62, %s64
      %p71 = scmp.eq.s32.totalorder %s19, 1
      %p72 = por %p70, %p71
      %p73 = scmp.ne.s32.totalorder %s64, %s65
      %p74 = scmp.eq.s32.totalorder %s19, 0
      %p75 = por %p73, %p74
      %p76 = scmp.ne.s32.totalorder %s64, %s65
      %p77 = scmp.eq.s32.totalorder %s20, 1
      %p78 = por %p76, %p77
      %p80 = scmp.ne.s32.totalorder %s65, %s79
      %p81 = scmp.eq.s32.totalorder %s20, 0
      %p82 = por %p80, %p81
      %s84 = sadd.s32 %s83, 1
      %p87 = scmp.eq.s32.totalorder %s14, 1
      %p88 = scmp.ne.s32.totalorder %s83, %s85
      %p89 = scmp.eq.s32.totalorder %s14, 0
      %p90 = por %p88, %p89
      %p91 = scmp.ne.s32.totalorder %s83, %s85
      %p92 = scmp.eq.s32.totalorder %s19, 1
      %p93 = por %p91, %p92
      %p94 = scmp.ne.s32.totalorder %s85, %s86
      %p95 = scmp.eq.s32.totalorder %s19, 0
      %p96 = por %p94, %p95
      %p97 = scmp.ne.s32.totalorder %s85, %s86
      %p98 = scmp.eq.s32.totalorder %s20, 1
      %p99 = por %p97, %p98
      %p101 = scmp.ne.s32.totalorder %s86, %s100
      %p102 = scmp.eq.s32.totalorder %s20, 0
      %p103 = por %p101, %p102
      %s104 = ssub.s32 %s21, %s33
      %p105 = scmp.eq.s32.totalorder %s104, 0
      %s107 = sadd.s32 %s106, 1
      %s108 = scalar_select %p105, %s106, %s107
      %p111 = pneg %p105
      %p112 = scmp.eq.s32.totalorder %s14, 1
      %p113 = por %p111, %p112
      %p114 = scmp.ne.s32.totalorder %s106, %s109
      %p115 = scmp.eq.s32.totalorder %s14, 0
      %p116 = por %p114, %p115
      %p117 = scmp.ne.s32.totalorder %s106, %s109
      %p118 = scmp.eq.s32.totalorder %s19, 1
      %p119 = por %p117, %p118
      %p120 = scmp.ne.s32.totalorder %s109, %s110
      %p121 = scmp.eq.s32.totalorder %s19, 0
      %p122 = por %p120, %p121
      %p123 = scmp.ne.s32.totalorder %s109, %s110
      %p124 = scmp.eq.s32.totalorder %s20, 1
      %p125 = por %p123, %p124
      %p127 = scmp.ne.s32.totalorder %s110, %s126
      %p128 = scmp.eq.s32.totalorder %s20, 0
      %p129 = por %p127, %p128
      %p130 = scmp.le.s32.totalorder 1, %s14
      %p131 = scmp.lt.s32.totalorder %s14, 3
      %p132 = pnand %p130, %p131
      %p133 = pneg %p132
      // Predicated region
      $region9: #{tpu_custom_call.1} parent=5 // pred_check
        _
      $region10: #{tpu_custom_call.1} parent=5 // pred_check_branch
        %135 = sbr.rel (%p132) target = $region12
      $region11: #{tpu_custom_call.1} parent=5 // pred_region
        %s136 = ssub.s32 %s14, 1
        // Predicated region
        $region13: #{tpu_custom_call.1} parent=11 // pred_check
          %p137 = pneg %p75
        $region14: #{tpu_custom_call.1} parent=11 // pred_check_branch
          %139 = sbr.rel (%p137) target = $region16
        $region15: #{tpu_custom_call.1} parent=11 // pred_region
          %s141 = ssub.s32 512, 512
          %142 = vsyncadd [#allocation7], %s141
          %s143 = sshll.u32 [#allocation6], 4
          %s144 = int_to_ptr.vmem [resolvable:$true] %s143
          %149 = dma.hbm_to_vmem [thread:$0]  %s1, 512, %s144, [#allocation7], 128, 128, 8
        $region16: #{tpu_custom_call.1} parent=11 // pred_fallthru
          _
        // Predicated region
        $region17: #{tpu_custom_call.1} parent=11 // pred_check
          %p150 = pneg %p96
        $region18: #{tpu_custom_call.1} parent=11 // pred_check_branch
          %152 = sbr.rel (%p150) target = $region20
        $region19: #{tpu_custom_call.1} parent=11 // pred_region
          _
        $region20: #{tpu_custom_call.1} parent=11 // pred_fallthru
          _
      $region12: #{tpu_custom_call.1} parent=5 // pred_fallthru
        _
      %p153 = scmp.lt.s32.totalorder %s14, 2
      // Predicated region
      $region21: #{tpu_custom_call.1} parent=5 // pred_check
        %p154 = pneg %p153
      $region22: #{tpu_custom_call.1} parent=5 // pred_check_branch
        %156 = sbr.rel (%p154) target = $region24
      $region23: #{tpu_custom_call.1} parent=5 // pred_region
        // Predicated region
        $region25: #{tpu_custom_call.1} parent=23 // pred_check
          %p157 = pneg %p48
        $region26: #{tpu_custom_call.1} parent=23 // pred_check_branch
          %159 = sbr.rel (%p157) target = $region28
        $region27: #{tpu_custom_call.1} parent=23 // pred_region
          %s160 = sand.u32 %s38, 1
          %s161 = scalar_lea.sflag [#allocation4], %s160
          %s162 = sand.u32 %s38, 1
          %s163 = smul.addr %s162, 16
          %s164 = scalar_lea.vmem [#allocation3], %s163
          %s165 = smul.u32 2, %s21
          %s167 = ssub.s32 256, 256
          %168 = vsyncadd %s161, %s167
          %s169 = smul.addr %s165, 2
          %s170 = sadd.s32 %s22, %s169
          %s171 = smul.addr %s170, 128
          %s172 = scalar_lea.hbm %s0, %s171
          %s173 = sshll.u32 %s164, 4
          %s174 = int_to_ptr.vmem [resolvable:$true] %s173
          %179 = dma.hbm_to_vmem [thread:$0]  %s172, 256, %s174, %s161, 256, 128, 8
        $region28: #{tpu_custom_call.1} parent=23 // pred_fallthru
          _
      $region24: #{tpu_custom_call.1} parent=5 // pred_fallthru
        _
      %p180 = scmp.le.s32.totalorder 1, %s14
      %p181 = scmp.lt.s32.totalorder %s14, 3
      %p182 = pnand %p180, %p181
      %p183 = pneg %p182
      // Predicated region
      $region29: #{tpu_custom_call.1} parent=5 // pred_check
        _
      $region30: #{tpu_custom_call.1} parent=5 // pred_check_branch
        %185 = sbr.rel (%p182) target = $region32
      $region31: #{tpu_custom_call.1} parent=5 // pred_region
        %s186 = ssub.s32 %s14, 1
        %s187 = sand.u32 %s41, 1
        %s188 = scalar_lea.sflag [#allocation4], %s187
        %s189 = sand.u32 %s41, 1
        %s190 = smul.addr %s189, 16
        %s191 = scalar_lea.vmem [#allocation3], %s190
        // Predicated region
        $region33: #{tpu_custom_call.1} parent=31 // pred_check
          %p192 = pneg %p54
        $region34: #{tpu_custom_call.1} parent=31 // pred_check_branch
          %194 = sbr.rel (%p192) target = $region36
        $region35: #{tpu_custom_call.1} parent=31 // pred_region
          %195 = dma.done %s188, 256
        $region36: #{tpu_custom_call.1} parent=31 // pred_fallthru
          _
        // Predicated region
        $region37: #{tpu_custom_call.1} parent=31 // pred_check
          %p196 = pneg %p75
        $region38: #{tpu_custom_call.1} parent=31 // pred_check_branch
          %198 = sbr.rel (%p196) target = $region40
        $region39: #{tpu_custom_call.1} parent=31 // pred_region
          %199 = dma.done [#allocation7], 512
        $region40: #{tpu_custom_call.1} parent=31 // pred_fallthru
          _
        %s200 = sand.u32 %s41, 1
        %s201 = scalar_lea.sflag [#allocation4], %s200
        %s202 = sand.u32 %s41, 1
        %s203 = smul.addr %s202, 16
        %s204 = scalar_lea.vmem [#allocation3], %s203
        %p205 = pneg %p54
        %p206 = pneg %p51
        %p207 = pneg %p75
        %p208 = pneg %p72
        %p209 = pneg %p96
        %p210 = pneg %p93
        %p211 = pneg %p122
        %p212 = pneg %p119
        %s213 = smul.u32 2, %s23
        %p214 = scmp.eq.s32.totalorder %s24, 0
        // Predicated region
        $region41: #{tpu_custom_call.1} parent=31 // pred_check
          %p215 = pneg %p214
        $region42: #{tpu_custom_call.1} parent=31 // pred_check_branch
          %217 = sbr.rel (%p215) target = $region44
        $region43: #{tpu_custom_call.1} parent=31 // pred_region
          %vm218 = vcmask 254976
          %219 = vst.msk [vmem:[#allocation2] sm:$0x3] %vm218, 0.0
        $region44: #{tpu_custom_call.1} parent=31 // pred_fallthru
          _
        %v220 = vld [vmem:[#allocation2] sm:$0x3]
        %v221 = vld [vmem:[%s191] sm:$0xff]
        %v222 = vld [vmem:[%s191 + $0x8] sm:$0xff]
        %vm223 = vcmask 261120
        %v224 = vsel %vm223, %v221, 0.0
        %v225 = vrot.slane %v224, 4
        %v226 = vadd.f32 %v224, %v225
        %v227 = vrot.slane %v226, 2
        %v228 = vadd.f32 %v226, %v227
        %v229 = vrot.slane %v228, 1
        %v230 = vadd.f32 %v228, %v229
        %v231 = vsel %vm223, %v222, 0.0
        %v232 = vrot.slane %v231, 4
        %v233 = vadd.f32 %v231, %v232
        %v234 = vrot.slane %v233, 2
        %v235 = vadd.f32 %v233, %v234
        %v236 = vrot.slane %v235, 1
        %v237 = vadd.f32 %v235, %v236
        %vm240 = vcmask 1041409
        %v241 = vsel %vm240, %v237, %v230
        %v243 = vadd.f32 %v220, %v241
        %vm244 = vcmask 254976
        %245 = vst.msk [vmem:[#allocation2] sm:$0x3] %vm244, %v243
        %p246 = scmp.eq.s32.totalorder %s24, 1
        // Predicated region
        $region45: #{tpu_custom_call.1} parent=31 // pred_check
          %p247 = pneg %p246
        $region46: #{tpu_custom_call.1} parent=31 // pred_check_branch
          %249 = sbr.rel (%p247) target = $region48
        $region47: #{tpu_custom_call.1} parent=31 // pred_region
          %v250 = vld [vmem:[#allocation2] sm:$0x3]
          %v251 = vmul.f32 %v250, 0.0625
          %v252 = vld [vmem:[#allocation6] sm:$0xff]
          %v253 = vld [vmem:[#allocation6 + $0x8] sm:$0xff]
          %v254 = vld [vmem:[#allocation6 + $0x10] sm:$0xff]
          %v255 = vld [vmem:[#allocation6 + $0x18] sm:$0xff]
          %v256 = vld [vmem:[%s2] sm:$0x1]
          %v258 = vlaneseq
          %v259 = vshrl.u32 %v258, 7
          %v260 = vsub.s32 0, %v259
          %v261 = vrot.slane %v256, %v260
          %v264 = vsel %vm223, %v251, 0
          %266 = vmatprep.subr.mxu0 0.0
          %267 = vmatpush1.msra.mxu0 %v252
          %268 = vmatprep.subr.mxu0 0.0
          %269 = vmatpush1.msra.mxu0 %v253
          %270 = vmatprep.subr.mxu0 0.0
          %271 = vmatpush1.msra.mxu0 %v254
          %272 = vmatprep.subr.mxu0 0.0
          %273 = vmatpush1.msra.mxu0 %v255
          %274 = vmatprep.subr.mxu0 0.0
          %275 = vmatpush1.msra.mxu0 0.0
          %276 = vmatprep.subr.mxu0 0.0
          %277 = vmatpush1.msra.mxu0 0.0
          %278 = vmatprep.subr.mxu0 0.0
          %279 = vmatpush1.msra.mxu0 0.0
          %280 = vmatprep.subr.mxu0 0.0
          %281 = vmatpush1.msra.mxu0 0.0
          %282 = vmatprep.subr.mxu0 0.0
          %283 = vmatpush1.msra.mxu0 0.0
          %284 = vmatprep.subr.mxu0 0.0
          %285 = vmatpush1.msra.mxu0 0.0
          %286 = vmatprep.subr.mxu0 0.0
          %287 = vmatpush1.msra.mxu0 0.0
          %288 = vmatprep.subr.mxu0 0.0
          %289 = vmatpush1.msra.mxu0 0.0
          %290 = vmatprep.subr.mxu0 0.0
          %291 = vmatpush1.msra.mxu0 0.0
          %292 = vmatprep.subr.mxu0 0.0
          %293 = vmatpush1.msra.mxu0 0.0
          %294 = vmatprep.subr.mxu0 0.0
          %295 = vmatpush1.msra.mxu0 0.0
          %296 = vmatprep.subr.mxu0 0.0
          %297 = vmatpush1.msra.mxu0 0.0
          %298 = vmatprep.subr.mxu0 0.0
          %299 = vmatpush1.msra.mxu0 0.0
          %300 = vmatprep.subr.mxu0 0.0
          %301 = vmatpush1.msra.mxu0 0.0
          %302 = vmatprep.subr.mxu0 0.0
          %303 = vmatpush1.msra.mxu0 0.0
          %304 = vmatprep.subr.mxu0 0.0
          %305 = vmatpush1.msra.mxu0 0.0
          %306 = vmatprep.subr.mxu0 0.0
          %307 = vmatpush1.msra.mxu0 0.0
          %308 = vmatprep.subr.mxu0 0.0
          %309 = vmatpush1.msra.mxu0 0.0
          %310 = vmatprep.subr.mxu0 0.0
          %311 = vmatpush1.msra.mxu0 0.0
          %312 = vmatprep.subr.mxu0 0.0
          %313 = vmatpush1.msra.mxu0 0.0
          %314 = vmatprep.subr.mxu0 0.0
          %315 = vmatpush1.msra.mxu0 0.0
          %316 = vmatprep.subr.mxu0 0.0
          %317 = vmatpush1.msra.mxu0 0.0
          %318 = vmatprep.subr.mxu0 0.0
          %319 = vmatpush1.msra.mxu0 0.0
          %320 = vmatprep.subr.mxu0 0.0
          %321 = vmatpush1.msra.mxu0 0.0
          %322 = vmatprep.subr.mxu0 0.0
          %323 = vmatpush1.msra.mxu0 0.0
          %324 = vmatprep.subr.mxu0 0.0
          %325 = vmatpush1.msra.mxu0 0.0
          %326 = vmatprep.subr.mxu0 0.0
          %327 = vmatpush1.msra.mxu0 0.0
          %328 = vmatprep.subr.mxu0 0.0
          %329 = vmatpush1.msra.mxu0 0.0
          %330 = vmatprep.mubr.f32.mxu0 0.0
          %331 = vmatmul.mubr.f32.gmra.mrb[0].mxu0 %v264
          %v332 = vpop.f32.mrb[0].mxu0
          %v333 = vadd.f32 %v261, %v332
          %v334 = vpop.f32.mrb[0].mxu0
          %335 = vdwg.mxu0
          %336 = vst [vmem:[#allocation8] sm:$0x3] %v333
        $region48: #{tpu_custom_call.1} parent=31 // pred_fallthru
          _
        // Predicated region
        $region49: #{tpu_custom_call.1} parent=31 // pred_check
          %p337 = pneg %p119
        $region50: #{tpu_custom_call.1} parent=31 // pred_check_branch
          %339 = sbr.rel (%p337) target = $region52
        $region51: #{tpu_custom_call.1} parent=31 // pred_region
          %s341 = ssub.s32 32, 32
          %342 = vsyncadd [#allocation5], %s341
          %s343 = smul.addr %s23, 32
          %s344 = scalar_lea.hbm %s3, %s343
          %s346 = sshll.u32 [#allocation8], 4
          %s347 = int_to_ptr.vmem [resolvable:$true] %s346
          %349 = dma.vmem_to_hbm [thread:$0]  %s347, 32, %s344, [#allocation5]
        $region52: #{tpu_custom_call.1} parent=31 // pred_fallthru
          _
        // Predicated region
        $region53: #{tpu_custom_call.1} parent=31 // pred_check
          %p350 = pneg %p119
        $region54: #{tpu_custom_call.1} parent=31 // pred_check_branch
          %352 = sbr.rel (%p350) target = $region56
        $region55: #{tpu_custom_call.1} parent=31 // pred_region
          %353 = dma.done [#allocation5], 32
        $region56: #{tpu_custom_call.1} parent=31 // pred_fallthru
          _
      $region32: #{tpu_custom_call.1} parent=5 // pred_fallthru
        _
      %p354 = scmp.le.s32.totalorder 2, %s14
      // Predicated region
      $region57: #{tpu_custom_call.1} parent=5 // pred_check
        %p355 = pneg %p354
      $region58: #{tpu_custom_call.1} parent=5 // pred_check_branch
        %357 = sbr.rel (%p355) target = $region60
      $region59: #{tpu_custom_call.1} parent=5 // pred_region
        %s358 = ssub.s32 %s14, 2
      $region60: #{tpu_custom_call.1} parent=5 // pred_fallthru
        _
    $region6: #{tpu_custom_call.1} parent=1 // loop_footer
      %s18 = sadd.s32 1, %s14
    $region7: #{tpu_custom_call.1} parent=1 // loop_footer_branch
      %13 = sbr.rel target = $region3
    $region8: #{tpu_custom_call.1} parent=1 // loop_exit
      _
    %359 = vsyncpa [#allocation4], 1
    %s360 = scalar_lea.sflag [#allocation4], 1
    %361 = vsyncpa %s360, 1
    %362 = vsyncpa [#allocation7], 1
    %363 = vsyncpa [#allocation5], 1
    %s364 = scalar_lea.sflag [#allocation5], 1
    %365 = vsyncpa %s364, 1

</llo_original>
